<compile_context>
chip_gen: v5e
topology: v5e:2x2
jax: 0.10.0
libtpu: 0.0.40
codegen_flags: <defaults>
</compile_context>

<pallas_src>
import numpy as np
import jax
import jax.numpy as jnp
from jax.experimental import pallas as pl
from jax.experimental.pallas import tpu as pltpu

_LANE = 128
_SUB = 8


def _cdiv(a, b):
    return -(-a // b)


def _round_up(v, m):
    return _cdiv(v, m) * m


def _mse_kernel(x_ref, t_ref, out_ref):
    j = pl.program_id(2)

    @pl.when(j == 0)
    def _init():
        out_ref[...] = jnp.zeros_like(out_ref)

    x = x_ref[0].astype(jnp.float32)          # (N, TS, 128)
    t = t_ref[0].astype(jnp.float32)          # (1, TS, 128) -> broadcast over views
    diff = x - t
    sq = diff * diff                          # element-wise, VPU only
    sq = jnp.sum(sq, axis=0)                  # (TS, 128): leading-axis vector adds
    part = jnp.sum(sq.reshape(-1, _SUB, _LANE), axis=0)   # (8, 128), one vreg
    out_ref[0, 0] += part                     # single-vreg resident accumulator


def _vmem_budget_bytes():
    """Generation-aware scoped-VMEM limit and double-buffered block budget."""
    try:
        cap = int(pltpu.get_tpu_info().vmem_capacity_bytes)
    except Exception:
        cap = 64 * 1024 * 1024                # conservative (v7x per-TC VMEM)
    limit = min(int(cap * 0.75), 96 * 1024 * 1024)   # 48 MiB on v7x, 96 MiB v5e/v6e
    budget = int(limit * 0.70)                        # headroom for pipeline/internals
    return limit, budget


def _choose_ts(s_rows, n_views, itemsize, budget_bytes):
    """Largest multiple-of-8 sublane tile whose real VMEM footprint fits the budget.

    Per unit of TS: x block has n_views sublane-rows, target block has 1, each
    double-buffered, in the input dtype (bf16 inputs get 2x larger tiles).
    """
    per_ts = 2 * (n_views + 1) * _LANE * itemsize
    ts = (budget_bytes // per_ts) // _SUB * _SUB
    ts = max(_SUB, ts)
    ts = min(ts, _round_up(s_rows, _SUB))
    return int(ts)


def mse_reconstruction_loss(x, target):
    """MSE(x, broadcast(target)) with 'mean' reduction (nn.MSELoss default)."""
    if x.ndim > target.ndim:
        # x: [B, N, *rest], target: [B, *rest]  (target.unsqueeze(1).expand_as(x))
        B, N = int(x.shape[0]), int(x.shape[1])
        rest = tuple(x.shape[2:])
        D = int(np.prod(rest)) if rest else 1
        full_tgt_shape = (x.shape[0],) + rest
        if tuple(target.shape) != full_tgt_shape:
            # TODO(synk): express singleton-dim expands via index_map instead.
            target = jnp.broadcast_to(target, full_tgt_shape)
        x3 = x.reshape(B, N, D)
        t3 = target.reshape(B, 1, D)
    else:
        # Same-rank path: target.expand_as(x).
        if tuple(target.shape) != tuple(x.shape):
            # TODO(synk): singleton-dim expand without materializing (rare path).
            target = jnp.broadcast_to(target, x.shape)
        B = int(x.shape[0])
        N = 1
        D = int(np.prod(x.shape[1:])) if x.ndim > 1 else 1
        x3 = x.reshape(B, 1, D)
        t3 = target.reshape(B, 1, D)

    count = B * N * D  # original element count for the mean

    itemsize = max(jnp.dtype(x3.dtype).itemsize, jnp.dtype(t3.dtype).itemsize)
    vmem_limit, budget = _vmem_budget_bytes()

    s_rows = _cdiv(D, _LANE)                       # feature sublane-rows (unpadded)
    ts = _choose_ts(s_rows, N, itemsize, budget)
    kd_total = _cdiv(s_rows, ts)

    # Keep both v7x TensorCores busy even when B is small/odd by splitting the
    # KD reduction tiles across a size-2 leading parallel axis.
    csplit = 2 if kd_total >= 2 else 1
    kd_total = _round_up(kd_total, csplit)
    kd = kd_total // csplit
    s_pad = kd_total * ts
    d_pad = s_pad * _LANE

    # Equal zero padding in x and target adds exactly 0 to the squared-diff sum.
    if d_pad != D:
        x3 = jnp.pad(x3, ((0, 0), (0, 0), (0, d_pad - D)))
        t3 = jnp.pad(t3, ((0, 0), (0, 0), (0, d_pad - D)))
    x4 = x3.reshape(B, N, s_pad, _LANE)
    t4 = t3.reshape(B, 1, s_pad, _LANE)

    cost = pl.CostEstimate(
        flops=int(3 * B * N * s_pad * _LANE),
        transcendentals=0,
        bytes_accessed=int((N + 1) * B * s_pad * _LANE * itemsize
                           + csplit * B * _SUB * _LANE * 4),
    )

    partials = pl.pallas_call(
        _mse_kernel,
        out_shape=jax.ShapeDtypeStruct((csplit, B, _SUB, _LANE), jnp.float32),
        grid_spec=pltpu.PrefetchScalarGridSpec(
            num_scalar_prefetch=0,
            grid=(csplit, B, kd),
            in_specs=[
                # lane/sublane-dense x slab: all N views of batch row b.
                pl.BlockSpec((1, N, ts, _LANE),
                             lambda c, b, j: (b, 0, c * kd + j, 0)),
                # matching target slab, broadcast over N inside the kernel.
                pl.BlockSpec((1, 1, ts, _LANE),
                             lambda c, b, j: (b, 0, c * kd + j, 0)),
            ],
            # single-vreg partial-sum output, resident across the j axis.
            out_specs=pl.BlockSpec((1, 1, _SUB, _LANE),
                                   lambda c, b, j: (c, b, 0, 0)),
        ),
        compiler_params=pltpu.CompilerParams(
            dimension_semantics=("parallel", "parallel", "arbitrary"),
            vmem_limit_bytes=vmem_limit,
        ),
        cost_estimate=cost,
    )(x4, t4)

    # Tiny final reduction + mean in plain JAX.
    return jnp.sum(partials) / count


if __name__ == "__main__":
    key = jax.random.PRNGKey(0)
    k1, k2, k3, k4, k5, k6 = jax.random.split(key, 6)

    # 5D path: x [B, N, C, H, W], target [B, C, H, W]
    B, N, C, H, W = 2, 3, 4, 16, 16
    x = jax.random.normal(k1, (B, N, C, H, W), dtype=jnp.float32)
    target = jax.random.normal(k2, (B, C, H, W), dtype=jnp.float32)
    loss = mse_reconstruction_loss(x, target)
    jax.block_until_ready(loss)
    ref = jnp.mean((x - target[:, None]) ** 2)
    assert jnp.allclose(loss, ref, atol=1e-5, rtol=1e-5), (loss, ref)

    # Same-rank path: target.expand_as(x)
    x2 = jax.random.normal(k3, (B, C, H, W), dtype=jnp.float32)
    t2 = jax.random.normal(k4, (B, C, H, W), dtype=jnp.float32)
    loss2 = mse_reconstruction_loss(x2, t2)
    jax.block_until_ready(loss2)
    ref2 = jnp.mean((x2 - t2) ** 2)
    assert jnp.allclose(loss2, ref2, atol=1e-5, rtol=1e-5), (loss2, ref2)

    # Feature size not a multiple of 128 (exercises lane/sublane padding).
    x5 = jax.random.normal(k5, (2, 3, 5, 7, 9), dtype=jnp.float32)
    t5 = jax.random.normal(k6, (2, 5, 7, 9), dtype=jnp.float32)
    loss5 = mse_reconstruction_loss(x5, t5)
    jax.block_until_ready(loss5)
    ref5 = jnp.mean((x5 - t5[:, None]) ** 2)
    assert jnp.allclose(loss5, ref5, atol=1e-5, rtol=1e-5), (loss5, ref5)

    print("KERNEL_OK")
</pallas_src>

<mosaic_0001>
module attributes {stable_mosaic.version = 11 : i64} {
  func.func @_mse_kernel(%arg0: i32, %arg1: i32, %arg2: i32, %arg3: memref<1x3x8x128xf32, #tpu.memory_space<vmem>>, %arg4: memref<1x1x8x128xf32, #tpu.memory_space<vmem>>, %arg5: memref<1x1x8x128xf32, #tpu.memory_space<vmem>>) attributes {dimension_semantics = [#tpu.dimension_semantics<parallel>, #tpu.dimension_semantics<parallel>, #tpu.dimension_semantics<arbitrary>], iteration_bounds = array<i64: 1, 2, 1>, scalar_prefetch = 0 : i64, scratch_operands = 0 : i64, tpu.core_type = #tpu.core_type<tc>, window_params = [{transform_indices = @transform_0, window_bounds = array<i64: 1, 3, 8, 128>}, {transform_indices = @transform_1, window_bounds = array<i64: 1, 1, 8, 128>}, {transform_indices = @transform_2, window_bounds = array<i64: 1, 1, 8, 128>}]} {
    %c0_i32 = arith.constant 0 : i32
    %0 = arith.cmpi eq, %arg2, %c0_i32 : i32
    %1 = arith.extui %0 : i1 to i32
    %c0_i32_0 = arith.constant 0 : i32
    %2 = arith.cmpi ne, %1, %c0_i32_0 : i32
    scf.if %2 {
      %cst_17 = arith.constant 0.000000e+00 : f32
      %19 = vector.broadcast %cst_17 : f32 to vector<1x1x8x128xf32>
      %c0_18 = arith.constant 0 : index
      %c0_19 = arith.constant 0 : index
      %c0_20 = arith.constant 0 : index
      %c0_21 = arith.constant 0 : index
      %20 = vector.load %arg5[%c0_18, %c0_19, %c0_20, %c0_21] : memref<1x1x8x128xf32, #tpu.memory_space<vmem>>, vector<1x1x8x128xf32>
      tpu.vector_store %arg5[%c0_18, %c0_19, %c0_20, %c0_21], %19 {strides = array<i32>} : memref<1x1x8x128xf32, #tpu.memory_space<vmem>>, vector<1x1x8x128xf32>,
    } else {
    }
    %c0 = arith.constant 0 : index
    %c0_1 = arith.constant 0 : index
    %c0_2 = arith.constant 0 : index
    %c0_3 = arith.constant 0 : index
    %3 = vector.load %arg3[%c0, %c0_1, %c0_2, %c0_3] : memref<1x3x8x128xf32, #tpu.memory_space<vmem>>, vector<1x3x8x128xf32>
    %4 = vector.shape_cast %3 : vector<1x3x8x128xf32> to vector<3x8x128xf32>
    %c0_4 = arith.constant 0 : index
    %c0_5 = arith.constant 0 : index
    %c0_6 = arith.constant 0 : index
    %c0_7 = arith.constant 0 : index
    %5 = vector.load %arg4[%c0_4, %c0_5, %c0_6, %c0_7] : memref<1x1x8x128xf32, #tpu.memory_space<vmem>>, vector<1x1x8x128xf32>
    %6 = vector.shape_cast %5 : vector<1x1x8x128xf32> to vector<1x8x128xf32>
    %7 = vector.broadcast %6 : vector<1x8x128xf32> to vector<3x8x128xf32>
    %8 = arith.subf %4, %7 : vector<3x8x128xf32>
    %9 = arith.mulf %8, %8 : vector<3x8x128xf32>
    %cst = arith.constant dense<0.000000e+00> : vector<8x128xf32>
    %10 = vector.multi_reduction <add>, %9, %cst [0] : vector<3x8x128xf32> to vector<8x128xf32>
    %11 = vector.shape_cast %10 : vector<8x128xf32> to vector<1x8x128xf32>
    %cst_8 = arith.constant dense<0.000000e+00> : vector<8x128xf32>
    %12 = vector.multi_reduction <add>, %11, %cst_8 [0] : vector<1x8x128xf32> to vector<8x128xf32>
    %c0_9 = arith.constant 0 : index
    %c0_10 = arith.constant 0 : index
    %c0_11 = arith.constant 0 : index
    %c0_12 = arith.constant 0 : index
    %13 = vector.load %arg5[%c0_9, %c0_10, %c0_11, %c0_12] : memref<1x1x8x128xf32, #tpu.memory_space<vmem>>, vector<1x1x8x128xf32>
    %14 = vector.shape_cast %13 : vector<1x1x8x128xf32> to vector<8x128xf32>
    %15 = arith.addf %14, %12 : vector<8x128xf32>
    %c0_13 = arith.constant 0 : index
    %c0_14 = arith.constant 0 : index
    %c0_15 = arith.constant 0 : index
    %c0_16 = arith.constant 0 : index
    %16 = vector.load %arg5[%c0_13, %c0_14, %c0_15, %c0_16] : memref<1x1x8x128xf32, #tpu.memory_space<vmem>>, vector<1x1x8x128xf32>
    %17 = vector.shape_cast %16 : vector<1x1x8x128xf32> to vector<8x128xf32>
    %18 = vector.shape_cast %15 : vector<8x128xf32> to vector<1x1x8x128xf32>
    tpu.vector_store %arg5[%c0_13, %c0_14, %c0_15, %c0_16], %18 {strides = array<i32>} : memref<1x1x8x128xf32, #tpu.memory_space<vmem>>, vector<1x1x8x128xf32>,
    return
  }
  func.func @transform_0(%arg0: i32, %arg1: i32, %arg2: i32) -> (i32, i32, i32, i32) {
    %c1_i32 = arith.constant 1 : i32
    %0 = arith.muli %arg0, %c1_i32 : i32
    %1 = arith.addi %0, %arg2 : i32
    %c0_i32 = arith.constant 0 : i32
    %c0_i32_0 = arith.constant 0 : i32
    %c0_i32_1 = arith.constant 0 : i32
    return %arg1, %c0_i32, %1, %c0_i32_0 : i32, i32, i32, i32
  }
  func.func @transform_1(%arg0: i32, %arg1: i32, %arg2: i32) -> (i32, i32, i32, i32) {
    %c1_i32 = arith.constant 1 : i32
    %0 = arith.muli %arg0, %c1_i32 : i32
    %1 = arith.addi %0, %arg2 : i32
    %c0_i32 = arith.constant 0 : i32
    %c0_i32_0 = arith.constant 0 : i32
    %c0_i32_1 = arith.constant 0 : i32
    return %arg1, %c0_i32, %1, %c0_i32_0 : i32, i32, i32, i32
  }
  func.func @transform_2(%arg0: i32, %arg1: i32, %arg2: i32) -> (i32, i32, i32, i32) {
    %c0_i32 = arith.constant 0 : i32
    %c0_i32_0 = arith.constant 0 : i32
    %c0_i32_1 = arith.constant 0 : i32
    return %arg0, %arg1, %c0_i32, %c0_i32_0 : i32, i32, i32, i32
  }
}

</mosaic_0001>

<llo_original>
// kernel: tpu_custom_call.1
$region0: #{tpu_custom_call.1}
  #allocation0 [shape = 'u32[]', space=smem, size = 0x4, offset = 0x4, fixed_abs, tag = 'smem constant byte address 0x4 - core index']
  #allocation1 [shape = 'u32[72,128]{1,0:T(1,128)}', space=vmem, size = 0x9000, scoped, tag = 'internal scratch']
  %s0 = inlined_call_operand.hbm [shape: f32[2,3,8,128], index: 0, kind: input, shape index: {}]
  %s1 = inlined_call_operand.hbm [shape: f32[2,1,8,128], index: 1, kind: input, shape index: {}]
  %s2 = inlined_call_operand.hbm [shape: f32[1,2,8,128], index: 2, kind: output, shape index: {}]
  %s3 = sld [smem:[#allocation0]]
  $region53: #{tpu_custom_call.1} parent=0
    _
  %s5 = ssub.s32 1, %s3
  %s6 = scalar_select 0, %s5, %s3
  $region1: #{tpu_custom_call.1} parent=0
    #allocation2 [shape = 'u8[24576]{0}', space=vmem, size = 0x6000, scoped, tag = 'input window, operand 0']
    #allocation3 [shape = 's32[2]{0}', space=sflag, size = 0x8, scoped, tag = 'scoped memory for tpu_custom_call.1']
    #allocation4 [shape = 's32[2]{0}', space=sflag, size = 0x8, scoped, tag = 'scoped memory for tpu_custom_call.1']
    #allocation5 [shape = 'u8[8192]{0}', space=vmem, size = 0x2000, scoped, tag = 'input window, operand 1']
    #allocation6 [shape = 's32[2]{0}', space=sflag, size = 0x8, scoped, tag = 'scoped memory for tpu_custom_call.1']
    #allocation7 [shape = 'u8[8192]{0}', space=vmem, size = 0x2000, scoped, tag = 'output window, operand 0']
    %7 = vsyncpa [#allocation3], 0
    %s8 = scalar_lea.sflag [#allocation3], 1
    %9 = vsyncpa %s8, 0
    %10 = vsyncpa [#allocation6], 0
    %s11 = scalar_lea.sflag [#allocation6], 1
    %12 = vsyncpa %s11, 0
    %13 = vsyncpa [#allocation4], 0
    %s14 = scalar_lea.sflag [#allocation4], 1
    %15 = vsyncpa %s14, 0
    loop: start=0, step=1, limit=4
    $region2: #{tpu_custom_call.1} parent=1 // loop_pre_header
      _
    $region3: #{tpu_custom_call.1} parent=1 // loop_header
      %s17 = sphi 0, %s21
      %p18 = scmp.ge.s32.totalorder %s17, 4
      %s24 = sphi 0, %s43
      %s25 = sphi 0, %s39
      %s26 = sphi 0, %s35
      %s27 = sphi 0, %s24
      %s28 = sphi 0, %s25
      %s29 = sphi 0, %s26
      %s30 = sphi 0, %s27
      %s31 = sphi 0, %s28
      %s32 = sphi 0, %s29
      %s50 = sphi 0, %s52
      %s53 = sphi 0, %s50
      %s54 = sphi 0, %s53
      %s70 = sphi 0, %s54
      %s80 = sphi 0, %s82
      %s83 = sphi 0, %s80
      %s84 = sphi 0, %s83
      %s100 = sphi 0, %s84
      %s108 = sphi 0, %s110
      %s111 = sphi 0, %s108
      %s112 = sphi 0, %s111
      %s128 = sphi 0, %s112
    $region4: #{tpu_custom_call.1} parent=1 // loop_header_branch
      %20 = sbr.rel (%p18) target = $region8
    $region5: #{tpu_custom_call.1} parent=1 // loop_body
      %s22 = ssub.s32 %s17, 1
      %s23 = ssub.s32 %s17, 2
      %s33 = sadd.s32 1, %s26
      %p34 = scmp.ge.s32.totalorder %s33, 1
      %s35 = scalar_select %p34, 0, %s33
      %s36 = sadd.s32 1, %s25
      %s37 = scalar_select %p34, %s36, %s25
      %p38 = scmp.ge.s32.totalorder %s37, 2
      %s39 = scalar_select %p38, 0, %s37
      %s40 = sadd.s32 1, %s24
      %s41 = scalar_select %p38, %s40, %s24
      %p42 = scmp.ge.s32.totalorder %s41, 1
      %s43 = scalar_select %p42, 0, %s41
      %s44 = sadd.s32 %s24, %s26
      %s45 = sadd.s32 %s43, %s35
      %s46 = ssub.s32 %s25, %s39
      %s47 = ssub.s32 %s44, %s45
      %s48 = sor.u32 %s46, %s47
      %p49 = scmp.eq.s32.totalorder %s48, 0
      %s51 = sadd.s32 %s50, 1
      %s52 = scalar_select %p49, %s50, %s51
      %p55 = pneg %p49
      %p56 = scmp.eq.s32.totalorder %s17, 1
      %p57 = por %p55, %p56
      %p58 = scmp.ne.s32.totalorder %s50, %s53
      %p59 = scmp.eq.s32.totalorder %s17, 0
      %p60 = por %p58, %p59
      %p61 = scmp.ne.s32.totalorder %s50, %s53
      %p62 = scmp.eq.s32.totalorder %s22, 1
      %p63 = por %p61, %p62
      %p64 = scmp.ne.s32.totalorder %s53, %s54
      %p65 = scmp.eq.s32.totalorder %s22, 0
      %p66 = por %p64, %p65
      %p67 = scmp.ne.s32.totalorder %s53, %s54
      %p68 = scmp.eq.s32.totalorder %s23, 1
      %p69 = por %p67, %p68
      %p71 = scmp.ne.s32.totalorder %s54, %s70
      %p72 = scmp.eq.s32.totalorder %s23, 0
      %p73 = por %p71, %p72
      %s74 = sadd.s32 %s24, %s26
      %s75 = sadd.s32 %s43, %s35
      %s76 = ssub.s32 %s25, %s39
      %s77 = ssub.s32 %s74, %s75
      %s78 = sor.u32 %s76, %s77
      %p79 = scmp.eq.s32.totalorder %s78, 0
      %s81 = sadd.s32 %s80, 1
      %s82 = scalar_select %p79, %s80, %s81
      %p85 = pneg %p79
      %p86 = scmp.eq.s32.totalorder %s17, 1
      %p87 = por %p85, %p86
      %p88 = scmp.ne.s32.totalorder %s80, %s83
      %p89 = scmp.eq.s32.totalorder %s17, 0
      %p90 = por %p88, %p89
      %p91 = scmp.ne.s32.totalorder %s80, %s83
      %p92 = scmp.eq.s32.totalorder %s22, 1
      %p93 = por %p91, %p92
      %p94 = scmp.ne.s32.totalorder %s83, %s84
      %p95 = scmp.eq.s32.totalorder %s22, 0
      %p96 = por %p94, %p95
      %p97 = scmp.ne.s32.totalorder %s83, %s84
      %p98 = scmp.eq.s32.totalorder %s23, 1
      %p99 = por %p97, %p98
      %p101 = scmp.ne.s32.totalorder %s84, %s100
      %p102 = scmp.eq.s32.totalorder %s23, 0
      %p103 = por %p101, %p102
      %s104 = ssub.s32 %s24, %s43
      %s105 = ssub.s32 %s25, %s39
      %s106 = sor.u32 %s104, %s105
      %p107 = scmp.eq.s32.totalorder %s106, 0
      %s109 = sadd.s32 %s108, 1
      %s110 = scalar_select %p107, %s108, %s109
      %p113 = pneg %p107
      %p114 = scmp.eq.s32.totalorder %s17, 1
      %p115 = por %p113, %p114
      %p116 = scmp.ne.s32.totalorder %s108, %s111
      %p117 = scmp.eq.s32.totalorder %s17, 0
      %p118 = por %p116, %p117
      %p119 = scmp.ne.s32.totalorder %s108, %s111
      %p120 = scmp.eq.s32.totalorder %s22, 1
      %p121 = por %p119, %p120
      %p122 = scmp.ne.s32.totalorder %s111, %s112
      %p123 = scmp.eq.s32.totalorder %s22, 0
      %p124 = por %p122, %p123
      %p125 = scmp.ne.s32.totalorder %s111, %s112
      %p126 = scmp.eq.s32.totalorder %s23, 1
      %p127 = por %p125, %p126
      %p129 = scmp.ne.s32.totalorder %s112, %s128
      %p130 = scmp.eq.s32.totalorder %s23, 0
      %p131 = por %p129, %p130
      %p132 = scmp.le.s32.totalorder 1, %s17
      %p133 = scmp.lt.s32.totalorder %s17, 3
      %p134 = pnand %p132, %p133
      %p135 = pneg %p134
      // Predicated region
      $region9: #{tpu_custom_call.1} parent=5 // pred_check
        _
      $region10: #{tpu_custom_call.1} parent=5 // pred_check_branch
        %137 = sbr.rel (%p134) target = $region12
      $region11: #{tpu_custom_call.1} parent=5 // pred_region
        %s138 = ssub.s32 %s17, 1
      $region12: #{tpu_custom_call.1} parent=5 // pred_fallthru
        _
      %p139 = scmp.lt.s32.totalorder %s17, 2
      // Predicated region
      $region13: #{tpu_custom_call.1} parent=5 // pred_check
        %p140 = pneg %p139
      $region14: #{tpu_custom_call.1} parent=5 // pred_check_branch
        %142 = sbr.rel (%p140) target = $region16
      $region15: #{tpu_custom_call.1} parent=5 // pred_region
        // Predicated region
        $region17: #{tpu_custom_call.1} parent=15 // pred_check
          %p143 = pneg %p60
        $region18: #{tpu_custom_call.1} parent=15 // pred_check_branch
          %145 = sbr.rel (%p143) target = $region20
        $region19: #{tpu_custom_call.1} parent=15 // pred_region
          %s146 = sand.u32 %s50, 1
          %s147 = scalar_lea.sflag [#allocation3], %s146
          %s148 = sand.u32 %s50, 1
          %s149 = smul.addr %s148, 24
          %s150 = scalar_lea.vmem [#allocation2], %s149
          %s151 = sadd.s32 %s24, %s26
          %153 = vsyncadd %s147, 0
          %s154 = smul.addr %s25, 3
          %s155 = sadd.s32 %s151, %s154
          %s156 = smul.addr %s155, 8
          %s157 = scalar_lea.hbm %s0, %s156
          %s158 = sshll.u32 %s157, 4
          %s159 = int_to_ptr.hbm [resolvable:$true] %s158
          %s160 = sshll.u32 %s150, 4
          %s161 = int_to_ptr.vmem [resolvable:$true] %s160
          %166 = dma.hbm_to_vmem [thread:$0]  %s159, 384, %s161, %s147, 128, 128, 8
        $region20: #{tpu_custom_call.1} parent=15 // pred_fallthru
          _
        // Predicated region
        $region21: #{tpu_custom_call.1} parent=15 // pred_check
          %p167 = pneg %p90
        $region22: #{tpu_custom_call.1} parent=15 // pred_check_branch
          %169 = sbr.rel (%p167) target = $region24
        $region23: #{tpu_custom_call.1} parent=15 // pred_region
          %s170 = sand.u32 %s80, 1
          %s171 = scalar_lea.sflag [#allocation6], %s170
          %s172 = sand.u32 %s80, 1
          %s173 = smul.addr %s172, 8
          %s174 = scalar_lea.vmem [#allocation5], %s173
          %s175 = sadd.s32 %s24, %s26
          %177 = vsyncadd %s171, 0
          %s178 = sadd.s32 %s175, %s25
          %s179 = smul.addr %s178, 8
          %s180 = scalar_lea.hbm %s1, %s179
          %s182 = sshll.u32 %s180, 4
          %s183 = int_to_ptr.hbm [resolvable:$true] %s182
          %s184 = sshll.u32 %s174, 4
          %s185 = int_to_ptr.vmem [resolvable:$true] %s184
          %187 = dma.hbm_to_vmem [thread:$0]  %s183, 128, %s185, %s171
        $region24: #{tpu_custom_call.1} parent=15 // pred_fallthru
          _
      $region16: #{tpu_custom_call.1} parent=5 // pred_fallthru
        _
      %p188 = scmp.le.s32.totalorder 1, %s17
      %p189 = scmp.lt.s32.totalorder %s17, 3
      %p190 = pnand %p188, %p189
      %p191 = pneg %p190
      // Predicated region
      $region25: #{tpu_custom_call.1} parent=5 // pred_check
        _
      $region26: #{tpu_custom_call.1} parent=5 // pred_check_branch
        %193 = sbr.rel (%p190) target = $region28
      $region27: #{tpu_custom_call.1} parent=5 // pred_region
        %s194 = ssub.s32 %s17, 1
        %s195 = sand.u32 %s53, 1
        %s196 = scalar_lea.sflag [#allocation3], %s195
        %s197 = sand.u32 %s53, 1
        %s198 = smul.addr %s197, 24
        %s199 = scalar_lea.vmem [#allocation2], %s198
        // Predicated region
        $region29: #{tpu_custom_call.1} parent=27 // pred_check
          %p200 = pneg %p66
        $region30: #{tpu_custom_call.1} parent=27 // pred_check_branch
          %202 = sbr.rel (%p200) target = $region32
        $region31: #{tpu_custom_call.1} parent=27 // pred_region
          %204 = dma.done %s196, 384
        $region32: #{tpu_custom_call.1} parent=27 // pred_fallthru
          _
        %s205 = sand.u32 %s83, 1
        %s206 = scalar_lea.sflag [#allocation6], %s205
        %s207 = sand.u32 %s83, 1
        %s208 = smul.addr %s207, 8
        %s209 = scalar_lea.vmem [#allocation5], %s208
        // Predicated region
        $region33: #{tpu_custom_call.1} parent=27 // pred_check
          %p210 = pneg %p96
        $region34: #{tpu_custom_call.1} parent=27 // pred_check_branch
          %212 = sbr.rel (%p210) target = $region36
        $region35: #{tpu_custom_call.1} parent=27 // pred_region
          %214 = dma.done %s206, 128
        $region36: #{tpu_custom_call.1} parent=27 // pred_fallthru
          _
        %s215 = sand.u32 %s53, 1
        %s216 = scalar_lea.sflag [#allocation3], %s215
        %s217 = sand.u32 %s53, 1
        %s218 = smul.addr %s217, 24
        %s219 = scalar_lea.vmem [#allocation2], %s218
        %p220 = pneg %p66
        %p221 = pneg %p63
        %s222 = sand.u32 %s83, 1
        %s223 = scalar_lea.sflag [#allocation6], %s222
        %s224 = sand.u32 %s83, 1
        %s225 = smul.addr %s224, 8
        %s226 = scalar_lea.vmem [#allocation5], %s225
        %p227 = pneg %p96
        %p228 = pneg %p93
        %p229 = pneg %p124
        %p230 = pneg %p121
        %s231 = sand.u32 %s111, 1
        %s232 = scalar_lea.sflag [#allocation4], %s231
        %s233 = sand.u32 %s111, 1
        %s234 = smul.addr %s233, 8
        %s235 = scalar_lea.vmem [#allocation7], %s234
        %s236 = sadd.s32 %s27, %s29
        %s237 = sadd.s32 %s27, %s29
        %p238 = scmp.eq.s32.totalorder %s29, 0
        // Predicated region
        $region37: #{tpu_custom_call.1} parent=27 // pred_check
          %p239 = pneg %p238
        $region38: #{tpu_custom_call.1} parent=27 // pred_check_branch
          %241 = sbr.rel (%p239) target = $region40
        $region39: #{tpu_custom_call.1} parent=27 // pred_region
          %242 = vst [vmem:[%s235] sm:$0xff] 0.0
        $region40: #{tpu_custom_call.1} parent=27 // pred_fallthru
          _
        %v243 = vld [vmem:[%s199] sm:$0xff]
        %v244 = vld [vmem:[%s199 + $0x8] sm:$0xff]
        %v245 = vld [vmem:[%s199 + $0x10] sm:$0xff]
        %v246 = vld [vmem:[%s209] sm:$0xff]
        %v247 = vsub.f32 %v243, %v246
        %v248 = vsub.f32 %v244, %v246
        %v249 = vsub.f32 %v245, %v246
        %v250 = vmul.f32 %v247, %v247
        %v251 = vmul.f32 %v248, %v248
        %v252 = vmul.f32 %v249, %v249
        %v253 = vadd.f32 %v250, %v251
        %v254 = vadd.f32 %v253, %v252
        %v255 = vadd.f32 %v254, 0.0
        %v256 = vld [vmem:[%s235] sm:$0xff]
        %v257 = vadd.f32 %v256, %v255
        %258 = vst [vmem:[%s235] sm:$0xff] %v257
        %s259 = sand.u32 %s111, 1
        %s260 = scalar_lea.sflag [#allocation4], %s259
        %s261 = sand.u32 %s111, 1
        %s262 = smul.addr %s261, 8
        %s263 = scalar_lea.vmem [#allocation7], %s262
        // Predicated region
        $region41: #{tpu_custom_call.1} parent=27 // pred_check
          %p264 = pneg %p121
        $region42: #{tpu_custom_call.1} parent=27 // pred_check_branch
          %266 = sbr.rel (%p264) target = $region44
        $region43: #{tpu_custom_call.1} parent=27 // pred_region
          %268 = vsyncadd %s260, 0
          %s269 = smul.addr %s27, 2
          %s270 = sadd.s32 %s28, %s269
          %s271 = smul.addr %s270, 8
          %s272 = scalar_lea.hbm %s2, %s271
          %s274 = sshll.u32 %s263, 4
          %s275 = int_to_ptr.vmem [resolvable:$true] %s274
          %s276 = sshll.u32 %s272, 4
          %s277 = int_to_ptr.hbm [resolvable:$true] %s276
          %279 = dma.vmem_to_hbm [thread:$0]  %s275, 128, %s277, %s260
        $region44: #{tpu_custom_call.1} parent=27 // pred_fallthru
          _
      $region28: #{tpu_custom_call.1} parent=5 // pred_fallthru
        _
      %p280 = scmp.le.s32.totalorder 2, %s17
      // Predicated region
      $region45: #{tpu_custom_call.1} parent=5 // pred_check
        %p281 = pneg %p280
      $region46: #{tpu_custom_call.1} parent=5 // pred_check_branch
        %283 = sbr.rel (%p281) target = $region48
      $region47: #{tpu_custom_call.1} parent=5 // pred_region
        %s284 = ssub.s32 %s17, 2
        // Predicated region
        $region49: #{tpu_custom_call.1} parent=47 // pred_check
          %p285 = pneg %p127
        $region50: #{tpu_custom_call.1} parent=47 // pred_check_branch
          %287 = sbr.rel (%p285) target = $region52
        $region51: #{tpu_custom_call.1} parent=47 // pred_region
          %s288 = sand.u32 %s112, 1
          %s289 = scalar_lea.sflag [#allocation4], %s288
          %s290 = sand.u32 %s112, 1
          %s291 = smul.addr %s290, 8
          %s292 = scalar_lea.vmem [#allocation7], %s291
          %294 = dma.done %s289, 128
        $region52: #{tpu_custom_call.1} parent=47 // pred_fallthru
          _
      $region48: #{tpu_custom_call.1} parent=5 // pred_fallthru
        _
    $region6: #{tpu_custom_call.1} parent=1 // loop_footer
      %s21 = sadd.s32 1, %s17
    $region7: #{tpu_custom_call.1} parent=1 // loop_footer_branch
      %16 = sbr.rel target = $region3
    $region8: #{tpu_custom_call.1} parent=1 // loop_exit
      _
    %295 = vsyncpa [#allocation3], 1
    %s296 = scalar_lea.sflag [#allocation3], 1
    %297 = vsyncpa %s296, 1
    %298 = vsyncpa [#allocation6], 1
    %s299 = scalar_lea.sflag [#allocation6], 1
    %300 = vsyncpa %s299, 1
    %301 = vsyncpa [#allocation4], 1
    %s302 = scalar_lea.sflag [#allocation4], 1
    %303 = vsyncpa %s302, 1

</llo_original>
